<compile_context>
chip_gen: v7x
topology: tpu7x:2x2x1
jax: 0.10.0
libtpu: 0.0.40
codegen_flags: <defaults>
</compile_context>

<pallas_src>
import functools

import jax
import jax.numpy as jnp
from jax import lax
from jax.experimental import pallas as pl
from jax.experimental.pallas import tpu as pltpu


def _conv_bn_silu_kernel(x_ref, w_ref, b_ref, o_ref, acc_ref, *, KH, KW, Wp, L_t):
    """One (image, H-tile) grid step: conv-kxk('same', s=1) + BN bias + SiLU.

    x_ref:   (Cin_p, S_t)         halo'd, zero-padded, flattened input tile
    w_ref:   (KH*KW, Cout, Cin_p) BN-scale-folded per-tap weight slabs
    b_ref:   (Cout, 1)            folded BN bias (f32)
    o_ref:   (Cout, L_t)          output tile, L_t = th*Wp
    acc_ref: (Cout, L_t)          f32 VMEM accumulator scratch
    """
    for t in range(KH * KW):                      # 9 static, unrolled taps
        kh, kw = divmod(t, KW)
        off = kh * Wp + kw                        # static lane offset
        tap = x_ref[:, off:off + L_t]             # (Cin_p, L_t) ref-window load
        part = lax.dot_general(w_ref[t], tap, (((1,), (0,)), ((), ())),
                               preferred_element_type=jnp.float32)
        if t == 0:
            acc_ref[...] = part
        else:
            acc_ref[...] += part
    y = acc_ref[...] + b_ref[...]                 # folded BN bias
    o_ref[...] = (y * jax.nn.sigmoid(y)).astype(o_ref.dtype)   # SiLU, lane-dense store


def _default_tile_h(H, Wp, Cin_p, Cout, KH, in_sz, out_sz, budget_bytes):
    """Pick an output-tile height whose pipelined working set fits the budget."""
    per_row = Wp * (2 * Cin_p * in_sz      # input tile (double-buffered)
                    + 2 * Cout * out_sz    # output tile (double-buffered)
                    + Cout * 4             # f32 accumulator scratch
                    + 2 * Cin_p * in_sz)   # tap window + matmul staging
    halo = 2 * KH * Wp * Cin_p * in_sz     # halo rows (both input buffers)
    th = (budget_bytes - halo) // max(per_row, 1)
    th = int(max(8, min(th, H)))
    if th > 8:
        th -= th % 8                       # sublane-friendly
    return max(1, min(th, H))


def conv_bn_silu(x_nchw, weight_oihw, bn_gamma, bn_beta, bn_mean, bn_var, *,
                 eps=1e-5, compute_dtype=jnp.bfloat16, out_dtype=jnp.bfloat16,
                 tile_h=None):
    """Conv2d(k, s=1, p=autopad(k), bias=False) + BatchNorm2d(eval) + SiLU.

    x_nchw:      (N, Cin, H, W)       PyTorch NCHW input
    weight_oihw: (Cout, Cin, KH, KW)  PyTorch conv weight
    returns:     (N, Cout, H, W)      out_dtype, NCHW
    """
    N, Cin, H, W = x_nchw.shape
    Cout, cin_w, KH, KW = weight_oihw.shape
    assert cin_w == Cin
    assert KH % 2 == 1 and KW % 2 == 1   # autopad == 'same' only for odd k, s=1
    ph, pw = KH // 2, KW // 2            # autopad(k)
    Wp = W + 2 * pw

    in_sz = jnp.dtype(compute_dtype).itemsize
    out_sz = jnp.dtype(out_dtype).itemsize

    # Pad channels to the sublane-packing multiple of the compute dtype.
    pack = 8 * 4 // in_sz                # 8 for f32, 16 for bf16
    Cin_p = -(-Cin // pack) * pack

    # Scoped-VMEM limit (per generation) and H-tile size from that budget.
    vmem_limit = 48 * 1024 * 1024
    try:
        vmem_limit = min(100 * 1024 * 1024,
                         int(pltpu.get_tpu_info().vmem_capacity_bytes) * 3 // 4)
    except Exception:
        pass
    if tile_h is None:
        tile_h = _default_tile_h(H, Wp, Cin_p, Cout, KH, in_sz, out_sz,
                                 budget_bytes=(2 * vmem_limit) // 3)
    th = max(1, min(int(tile_h), H))
    nH = -(-H // th)
    Hc = nH * th                          # H padded up to a tile multiple
    S_t = (th + 2 * ph + 1) * Wp          # halo'd tile; +1 zero row keeps taps in bounds
    L_t = th * Wp                         # flattened output-tile length

    # Fold BatchNorm (eval) into the conv weights; remaining per-channel bias.
    scale = bn_gamma.astype(jnp.float32) / jnp.sqrt(bn_var.astype(jnp.float32) + eps)
    bias = (bn_beta.astype(jnp.float32)
            - bn_mean.astype(jnp.float32) * scale).reshape(Cout, 1)
    w_f = weight_oihw.astype(jnp.float32) * scale[:, None, None, None]
    w_f = jnp.pad(w_f, ((0, 0), (0, Cin_p - Cin), (0, 0), (0, 0)))
    # Per-tap weight slabs (KH*KW, Cout, Cin_p), tap order (kh, kw).
    w_taps = jnp.transpose(w_f, (2, 3, 0, 1)).reshape(KH * KW, Cout, Cin_p)
    w_taps = w_taps.astype(compute_dtype)

    # Cast BEFORE padding (halves wrapper-side HBM traffic for x); zero-pad
    # channels + spatial, flatten rows onto the lane axis.
    x_p = jnp.pad(x_nchw.astype(compute_dtype),
                  ((0, 0), (0, Cin_p - Cin), (ph, Hc - H + ph + 1), (pw, pw)))
    x_lin = x_p.reshape(N, Cin_p, (Hc + 2 * ph + 1) * Wp)
    # Halo'd H-tiles as non-overlapping blocks (duplicates only KH rows/tile)
    # so the plain Blocked pipeline double-buffers them.
    x_tiles = jnp.stack([x_lin[:, :, j * L_t: j * L_t + S_t] for j in range(nH)],
                        axis=1)                                   # (N, nH, Cin_p, S_t)

    kernel = functools.partial(_conv_bn_silu_kernel, KH=KH, KW=KW, Wp=Wp, L_t=L_t)

    cost = pl.CostEstimate(
        flops=2 * N * Cout * KH * KW * Cin_p * Hc * Wp + 4 * N * Cout * Hc * Wp,
        transcendentals=N * Cout * Hc * Wp,
        bytes_accessed=(x_tiles.size * in_sz + w_taps.size * in_sz
                        + bias.size * 4 + N * nH * Cout * L_t * out_sz))

    out_t = pl.pallas_call(
        kernel,
        out_shape=jax.ShapeDtypeStruct((N, nH, Cout, L_t), out_dtype),
        grid_spec=pltpu.PrefetchScalarGridSpec(
            num_scalar_prefetch=0,
            grid=(N, nH),
            in_specs=[
                pl.BlockSpec((None, None, Cin_p, S_t), lambda n, j: (n, j, 0, 0)),
                pl.BlockSpec((KH * KW, Cout, Cin_p), lambda n, j: (0, 0, 0)),
                pl.BlockSpec((Cout, 1), lambda n, j: (0, 0)),
            ],
            out_specs=pl.BlockSpec((None, None, Cout, L_t), lambda n, j: (n, j, 0, 0)),
            scratch_shapes=[pltpu.VMEM((Cout, L_t), jnp.float32)],
        ),
        compiler_params=pltpu.CompilerParams(
            dimension_semantics=("parallel", "parallel"),
            vmem_limit_bytes=vmem_limit),
        cost_estimate=cost,
    )(x_tiles, w_taps, bias)

    # Un-tile / crop back to NCHW (layout plumbing done by XLA).
    # TODO(synk): a fused consumer could read the (N, nH, Cout, th*Wp) layout
    # directly and skip this transpose + crop copy.
    out = out_t.reshape(N, nH, Cout, th, Wp)
    out = jnp.transpose(out, (0, 2, 1, 3, 4)).reshape(N, Cout, Hc, Wp)
    return out[:, :, :H, :W]


def _reference_f32(x, w, gamma, beta, mean, var, eps=1e-5):
    """Full-f32 reference of the PyTorch module: conv -> BN(eval) -> SiLU."""
    ph, pw = w.shape[2] // 2, w.shape[3] // 2
    y = lax.conv_general_dilated(
        x.astype(jnp.float32), w.astype(jnp.float32),
        window_strides=(1, 1), padding=((ph, ph), (pw, pw)),
        dimension_numbers=("NCHW", "OIHW", "NCHW"),
        precision=lax.Precision.HIGHEST)
    scale = gamma / jnp.sqrt(var + eps)
    y = y * scale[None, :, None, None] + (beta - mean * scale)[None, :, None, None]
    return y * jax.nn.sigmoid(y)


def _reference_matching(x, w, gamma, beta, mean, var, eps=1e-5,
                        compute_dtype=jnp.bfloat16):
    """Same numerics as the kernel path: bf16-cast folded weights & input,
    exact products, f32 accumulation, f32 epilogue."""
    ph, pw = w.shape[2] // 2, w.shape[3] // 2
    scale = gamma / jnp.sqrt(var + eps)
    wf = (w.astype(jnp.float32) * scale[:, None, None, None]).astype(compute_dtype)
    xb = x.astype(compute_dtype)
    y = lax.conv_general_dilated(
        xb.astype(jnp.float32), wf.astype(jnp.float32),
        window_strides=(1, 1), padding=((ph, ph), (pw, pw)),
        dimension_numbers=("NCHW", "OIHW", "NCHW"),
        precision=lax.Precision.HIGHEST)
    y = y + (beta - mean * scale)[None, :, None, None]
    return y * jax.nn.sigmoid(y)


if __name__ == "__main__":
    # Module config: Conv(c1=4, c2=8, k=3, s=1) -> padding = autopad(3) = 1
    N, Cin, H, W = 2, 4, 16, 16
    Cout, K = 8, 3

    key = jax.random.PRNGKey(0)
    k0, k1, k2, k3, k4, k5 = jax.random.split(key, 6)

    # Inputs / params in PyTorch conventions (NCHW input, OIHW weight).
    x = jax.random.normal(k0, (N, Cin, H, W), jnp.float32)
    weight = jax.random.normal(k1, (Cout, Cin, K, K), jnp.float32) * 0.1
    bn_gamma = 1.0 + 0.1 * jax.random.normal(k2, (Cout,), jnp.float32)
    bn_beta = 0.1 * jax.random.normal(k3, (Cout,), jnp.float32)
    bn_mean = 0.05 * jax.random.normal(k4, (Cout,), jnp.float32)
    bn_var = 1.0 + 0.1 * jax.random.uniform(k5, (Cout,), jnp.float32)

    ref_b = _reference_matching(x, weight, bn_gamma, bn_beta, bn_mean, bn_var)
    ref_f = _reference_f32(x, weight, bn_gamma, bn_beta, bn_mean, bn_var)

    # tile_h=8 exercises the halo'd multi-tile path; tile_h=None picks the
    # budget-derived tile (one tile at this toy size).
    for th in (8, None):
        out = conv_bn_silu(x, weight, bn_gamma, bn_beta, bn_mean, bn_var, tile_h=th)
        out = jax.block_until_ready(out)
        assert out.shape == (N, Cout, H, W)
        out32 = out.astype(jnp.float32)

        # Tight check vs a reference using the identical bf16-cast operands
        # (bf16 output rounding is the only extra difference).
        err_b = float(jnp.max(jnp.abs(out32 - ref_b)))
        assert jnp.allclose(out32, ref_b, atol=2.5e-2, rtol=2.5e-2), (th, err_b)

        # Sanity check against the full-f32 module semantics.
        err_f = float(jnp.max(jnp.abs(out32 - ref_f)))
        assert jnp.allclose(out32, ref_f, atol=6e-2, rtol=6e-2), (th, err_f)

    print("KERNEL_OK")
</pallas_src>

<mosaic_0001>
module attributes {stable_mosaic.version = 11 : i64} {
  func.func @_conv_bn_silu_kernel(%arg0: i32, %arg1: i32, %arg2: memref<1x1x16x198xbf16, #tpu.memory_space<vmem>>, %arg3: memref<9x8x16xbf16, #tpu.memory_space<vmem>>, %arg4: memref<8x1xf32, #tpu.memory_space<vmem>>, %arg5: memref<1x1x8x144xbf16, #tpu.memory_space<vmem>>, %arg6: memref<8x144xf32, #tpu.memory_space<vmem>>) attributes {dimension_semantics = [#tpu.dimension_semantics<parallel>, #tpu.dimension_semantics<parallel>], iteration_bounds = array<i64: 2, 2>, scalar_prefetch = 0 : i64, scratch_operands = 1 : i64, tpu.core_type = #tpu.core_type<tc>, window_params = [{transform_indices = @transform_0, window_bounds = array<i64: 1, 1, 16, 198>}, {pipeline_mode = #tpu.pipeline_mode<synchronous>, transform_indices = @transform_1, window_bounds = array<i64: 9, 8, 16>}, {pipeline_mode = #tpu.pipeline_mode<synchronous>, transform_indices = @transform_2, window_bounds = array<i64: 8, 1>}, {transform_indices = @transform_3, window_bounds = array<i64: 1, 1, 8, 144>}]} {
    %c0 = arith.constant 0 : index
    %c0_0 = arith.constant 0 : index
    %c0_1 = arith.constant 0 : index
    %c0_2 = arith.constant 0 : index
    %0 = vector.load %arg2[%c0, %c0_0, %c0_1, %c0_2] : memref<1x1x16x198xbf16, #tpu.memory_space<vmem>>, vector<1x1x16x144xbf16>
    %1 = vector.shape_cast %0 : vector<1x1x16x144xbf16> to vector<16x144xbf16>
    %c0_3 = arith.constant 0 : index
    %c0_4 = arith.constant 0 : index
    %c0_5 = arith.constant 0 : index
    %2 = vector.load %arg3[%c0_3, %c0_4, %c0_5] : memref<9x8x16xbf16, #tpu.memory_space<vmem>>, vector<1x8x16xbf16>
    %3 = vector.shape_cast %2 : vector<1x8x16xbf16> to vector<8x16xbf16>
    %cst = arith.constant dense<0.000000e+00> : vector<8x144xf32>
    %4 = tpu.matmul %3, %1, %cst {dimension_numbers = #tpu.dot_dimension_numbers<[1], [0], [0], [1], [0, 0, 1, 1], [], []>} : vector<8x16xbf16>, vector<16x144xbf16>, vector<8x144xf32> -> vector<8x144xf32>
    %c0_6 = arith.constant 0 : index
    %c0_7 = arith.constant 0 : index
    %5 = vector.load %arg6[%c0_6, %c0_7] : memref<8x144xf32, #tpu.memory_space<vmem>>, vector<8x144xf32>
    tpu.vector_store %arg6[%c0_6, %c0_7], %4 {strides = array<i32>} : memref<8x144xf32, #tpu.memory_space<vmem>>, vector<8x144xf32>,
    %c0_8 = arith.constant 0 : index
    %c0_9 = arith.constant 0 : index
    %c0_10 = arith.constant 0 : index
    %c1 = arith.constant 1 : index
    %6 = vector.load %arg2[%c0_8, %c0_9, %c0_10, %c1] : memref<1x1x16x198xbf16, #tpu.memory_space<vmem>>, vector<1x1x16x144xbf16>
    %7 = vector.shape_cast %6 : vector<1x1x16x144xbf16> to vector<16x144xbf16>
    %c1_11 = arith.constant 1 : index
    %c0_12 = arith.constant 0 : index
    %c0_13 = arith.constant 0 : index
    %8 = vector.load %arg3[%c1_11, %c0_12, %c0_13] : memref<9x8x16xbf16, #tpu.memory_space<vmem>>, vector<1x8x16xbf16>
    %9 = vector.shape_cast %8 : vector<1x8x16xbf16> to vector<8x16xbf16>
    %cst_14 = arith.constant dense<0.000000e+00> : vector<8x144xf32>
    %10 = tpu.matmul %9, %7, %cst_14 {dimension_numbers = #tpu.dot_dimension_numbers<[1], [0], [0], [1], [0, 0, 1, 1], [], []>} : vector<8x16xbf16>, vector<16x144xbf16>, vector<8x144xf32> -> vector<8x144xf32>
    %c0_15 = arith.constant 0 : index
    %c0_16 = arith.constant 0 : index
    %11 = vector.load %arg6[%c0_15, %c0_16] : memref<8x144xf32, #tpu.memory_space<vmem>>, vector<8x144xf32>
    %12 = arith.addf %11, %10 : vector<8x144xf32>
    %c0_17 = arith.constant 0 : index
    %c0_18 = arith.constant 0 : index
    %13 = vector.load %arg6[%c0_17, %c0_18] : memref<8x144xf32, #tpu.memory_space<vmem>>, vector<8x144xf32>
    tpu.vector_store %arg6[%c0_17, %c0_18], %12 {strides = array<i32>} : memref<8x144xf32, #tpu.memory_space<vmem>>, vector<8x144xf32>,
    %c0_19 = arith.constant 0 : index
    %c0_20 = arith.constant 0 : index
    %c0_21 = arith.constant 0 : index
    %c2 = arith.constant 2 : index
    %14 = vector.load %arg2[%c0_19, %c0_20, %c0_21, %c2] : memref<1x1x16x198xbf16, #tpu.memory_space<vmem>>, vector<1x1x16x144xbf16>
    %15 = vector.shape_cast %14 : vector<1x1x16x144xbf16> to vector<16x144xbf16>
    %c2_22 = arith.constant 2 : index
    %c0_23 = arith.constant 0 : index
    %c0_24 = arith.constant 0 : index
    %16 = vector.load %arg3[%c2_22, %c0_23, %c0_24] : memref<9x8x16xbf16, #tpu.memory_space<vmem>>, vector<1x8x16xbf16>
    %17 = vector.shape_cast %16 : vector<1x8x16xbf16> to vector<8x16xbf16>
    %cst_25 = arith.constant dense<0.000000e+00> : vector<8x144xf32>
    %18 = tpu.matmul %17, %15, %cst_25 {dimension_numbers = #tpu.dot_dimension_numbers<[1], [0], [0], [1], [0, 0, 1, 1], [], []>} : vector<8x16xbf16>, vector<16x144xbf16>, vector<8x144xf32> -> vector<8x144xf32>
    %c0_26 = arith.constant 0 : index
    %c0_27 = arith.constant 0 : index
    %19 = vector.load %arg6[%c0_26, %c0_27] : memref<8x144xf32, #tpu.memory_space<vmem>>, vector<8x144xf32>
    %20 = arith.addf %19, %18 : vector<8x144xf32>
    %c0_28 = arith.constant 0 : index
    %c0_29 = arith.constant 0 : index
    %21 = vector.load %arg6[%c0_28, %c0_29] : memref<8x144xf32, #tpu.memory_space<vmem>>, vector<8x144xf32>
    tpu.vector_store %arg6[%c0_28, %c0_29], %20 {strides = array<i32>} : memref<8x144xf32, #tpu.memory_space<vmem>>, vector<8x144xf32>,
    %c0_30 = arith.constant 0 : index
    %c0_31 = arith.constant 0 : index
    %c0_32 = arith.constant 0 : index
    %c18 = arith.constant 18 : index
    %22 = vector.load %arg2[%c0_30, %c0_31, %c0_32, %c18] : memref<1x1x16x198xbf16, #tpu.memory_space<vmem>>, vector<1x1x16x144xbf16>
    %23 = vector.shape_cast %22 : vector<1x1x16x144xbf16> to vector<16x144xbf16>
    %c3 = arith.constant 3 : index
    %c0_33 = arith.constant 0 : index
    %c0_34 = arith.constant 0 : index
    %24 = vector.load %arg3[%c3, %c0_33, %c0_34] : memref<9x8x16xbf16, #tpu.memory_space<vmem>>, vector<1x8x16xbf16>
    %25 = vector.shape_cast %24 : vector<1x8x16xbf16> to vector<8x16xbf16>
    %cst_35 = arith.constant dense<0.000000e+00> : vector<8x144xf32>
    %26 = tpu.matmul %25, %23, %cst_35 {dimension_numbers = #tpu.dot_dimension_numbers<[1], [0], [0], [1], [0, 0, 1, 1], [], []>} : vector<8x16xbf16>, vector<16x144xbf16>, vector<8x144xf32> -> vector<8x144xf32>
    %c0_36 = arith.constant 0 : index
    %c0_37 = arith.constant 0 : index
    %27 = vector.load %arg6[%c0_36, %c0_37] : memref<8x144xf32, #tpu.memory_space<vmem>>, vector<8x144xf32>
    %28 = arith.addf %27, %26 : vector<8x144xf32>
    %c0_38 = arith.constant 0 : index
    %c0_39 = arith.constant 0 : index
    %29 = vector.load %arg6[%c0_38, %c0_39] : memref<8x144xf32, #tpu.memory_space<vmem>>, vector<8x144xf32>
    tpu.vector_store %arg6[%c0_38, %c0_39], %28 {strides = array<i32>} : memref<8x144xf32, #tpu.memory_space<vmem>>, vector<8x144xf32>,
    %c0_40 = arith.constant 0 : index
    %c0_41 = arith.constant 0 : index
    %c0_42 = arith.constant 0 : index
    %c19 = arith.constant 19 : index
    %30 = vector.load %arg2[%c0_40, %c0_41, %c0_42, %c19] : memref<1x1x16x198xbf16, #tpu.memory_space<vmem>>, vector<1x1x16x144xbf16>
    %31 = vector.shape_cast %30 : vector<1x1x16x144xbf16> to vector<16x144xbf16>
    %c4 = arith.constant 4 : index
    %c0_43 = arith.constant 0 : index
    %c0_44 = arith.constant 0 : index
    %32 = vector.load %arg3[%c4, %c0_43, %c0_44] : memref<9x8x16xbf16, #tpu.memory_space<vmem>>, vector<1x8x16xbf16>
    %33 = vector.shape_cast %32 : vector<1x8x16xbf16> to vector<8x16xbf16>
    %cst_45 = arith.constant dense<0.000000e+00> : vector<8x144xf32>
    %34 = tpu.matmul %33, %31, %cst_45 {dimension_numbers = #tpu.dot_dimension_numbers<[1], [0], [0], [1], [0, 0, 1, 1], [], []>} : vector<8x16xbf16>, vector<16x144xbf16>, vector<8x144xf32> -> vector<8x144xf32>
    %c0_46 = arith.constant 0 : index
    %c0_47 = arith.constant 0 : index
    %35 = vector.load %arg6[%c0_46, %c0_47] : memref<8x144xf32, #tpu.memory_space<vmem>>, vector<8x144xf32>
    %36 = arith.addf %35, %34 : vector<8x144xf32>
    %c0_48 = arith.constant 0 : index
    %c0_49 = arith.constant 0 : index
    %37 = vector.load %arg6[%c0_48, %c0_49] : memref<8x144xf32, #tpu.memory_space<vmem>>, vector<8x144xf32>
    tpu.vector_store %arg6[%c0_48, %c0_49], %36 {strides = array<i32>} : memref<8x144xf32, #tpu.memory_space<vmem>>, vector<8x144xf32>,
    %c0_50 = arith.constant 0 : index
    %c0_51 = arith.constant 0 : index
    %c0_52 = arith.constant 0 : index
    %c20 = arith.constant 20 : index
    %38 = vector.load %arg2[%c0_50, %c0_51, %c0_52, %c20] : memref<1x1x16x198xbf16, #tpu.memory_space<vmem>>, vector<1x1x16x144xbf16>
    %39 = vector.shape_cast %38 : vector<1x1x16x144xbf16> to vector<16x144xbf16>
    %c5 = arith.constant 5 : index
    %c0_53 = arith.constant 0 : index
    %c0_54 = arith.constant 0 : index
    %40 = vector.load %arg3[%c5, %c0_53, %c0_54] : memref<9x8x16xbf16, #tpu.memory_space<vmem>>, vector<1x8x16xbf16>
    %41 = vector.shape_cast %40 : vector<1x8x16xbf16> to vector<8x16xbf16>
    %cst_55 = arith.constant dense<0.000000e+00> : vector<8x144xf32>
    %42 = tpu.matmul %41, %39, %cst_55 {dimension_numbers = #tpu.dot_dimension_numbers<[1], [0], [0], [1], [0, 0, 1, 1], [], []>} : vector<8x16xbf16>, vector<16x144xbf16>, vector<8x144xf32> -> vector<8x144xf32>
    %c0_56 = arith.constant 0 : index
    %c0_57 = arith.constant 0 : index
    %43 = vector.load %arg6[%c0_56, %c0_57] : memref<8x144xf32, #tpu.memory_space<vmem>>, vector<8x144xf32>
    %44 = arith.addf %43, %42 : vector<8x144xf32>
    %c0_58 = arith.constant 0 : index
    %c0_59 = arith.constant 0 : index
    %45 = vector.load %arg6[%c0_58, %c0_59] : memref<8x144xf32, #tpu.memory_space<vmem>>, vector<8x144xf32>
    tpu.vector_store %arg6[%c0_58, %c0_59], %44 {strides = array<i32>} : memref<8x144xf32, #tpu.memory_space<vmem>>, vector<8x144xf32>,
    %c0_60 = arith.constant 0 : index
    %c0_61 = arith.constant 0 : index
    %c0_62 = arith.constant 0 : index
    %c36 = arith.constant 36 : index
    %46 = vector.load %arg2[%c0_60, %c0_61, %c0_62, %c36] : memref<1x1x16x198xbf16, #tpu.memory_space<vmem>>, vector<1x1x16x144xbf16>
    %47 = vector.shape_cast %46 : vector<1x1x16x144xbf16> to vector<16x144xbf16>
    %c6 = arith.constant 6 : index
    %c0_63 = arith.constant 0 : index
    %c0_64 = arith.constant 0 : index
    %48 = vector.load %arg3[%c6, %c0_63, %c0_64] : memref<9x8x16xbf16, #tpu.memory_space<vmem>>, vector<1x8x16xbf16>
    %49 = vector.shape_cast %48 : vector<1x8x16xbf16> to vector<8x16xbf16>
    %cst_65 = arith.constant dense<0.000000e+00> : vector<8x144xf32>
    %50 = tpu.matmul %49, %47, %cst_65 {dimension_numbers = #tpu.dot_dimension_numbers<[1], [0], [0], [1], [0, 0, 1, 1], [], []>} : vector<8x16xbf16>, vector<16x144xbf16>, vector<8x144xf32> -> vector<8x144xf32>
    %c0_66 = arith.constant 0 : index
    %c0_67 = arith.constant 0 : index
    %51 = vector.load %arg6[%c0_66, %c0_67] : memref<8x144xf32, #tpu.memory_space<vmem>>, vector<8x144xf32>
    %52 = arith.addf %51, %50 : vector<8x144xf32>
    %c0_68 = arith.constant 0 : index
    %c0_69 = arith.constant 0 : index
    %53 = vector.load %arg6[%c0_68, %c0_69] : memref<8x144xf32, #tpu.memory_space<vmem>>, vector<8x144xf32>
    tpu.vector_store %arg6[%c0_68, %c0_69], %52 {strides = array<i32>} : memref<8x144xf32, #tpu.memory_space<vmem>>, vector<8x144xf32>,
    %c0_70 = arith.constant 0 : index
    %c0_71 = arith.constant 0 : index
    %c0_72 = arith.constant 0 : index
    %c37 = arith.constant 37 : index
    %54 = vector.load %arg2[%c0_70, %c0_71, %c0_72, %c37] : memref<1x1x16x198xbf16, #tpu.memory_space<vmem>>, vector<1x1x16x144xbf16>
    %55 = vector.shape_cast %54 : vector<1x1x16x144xbf16> to vector<16x144xbf16>
    %c7 = arith.constant 7 : index
    %c0_73 = arith.constant 0 : index
    %c0_74 = arith.constant 0 : index
    %56 = vector.load %arg3[%c7, %c0_73, %c0_74] : memref<9x8x16xbf16, #tpu.memory_space<vmem>>, vector<1x8x16xbf16>
    %57 = vector.shape_cast %56 : vector<1x8x16xbf16> to vector<8x16xbf16>
    %cst_75 = arith.constant dense<0.000000e+00> : vector<8x144xf32>
    %58 = tpu.matmul %57, %55, %cst_75 {dimension_numbers = #tpu.dot_dimension_numbers<[1], [0], [0], [1], [0, 0, 1, 1], [], []>} : vector<8x16xbf16>, vector<16x144xbf16>, vector<8x144xf32> -> vector<8x144xf32>
    %c0_76 = arith.constant 0 : index
    %c0_77 = arith.constant 0 : index
    %59 = vector.load %arg6[%c0_76, %c0_77] : memref<8x144xf32, #tpu.memory_space<vmem>>, vector<8x144xf32>
    %60 = arith.addf %59, %58 : vector<8x144xf32>
    %c0_78 = arith.constant 0 : index
    %c0_79 = arith.constant 0 : index
    %61 = vector.load %arg6[%c0_78, %c0_79] : memref<8x144xf32, #tpu.memory_space<vmem>>, vector<8x144xf32>
    tpu.vector_store %arg6[%c0_78, %c0_79], %60 {strides = array<i32>} : memref<8x144xf32, #tpu.memory_space<vmem>>, vector<8x144xf32>,
    %c0_80 = arith.constant 0 : index
    %c0_81 = arith.constant 0 : index
    %c0_82 = arith.constant 0 : index
    %c38 = arith.constant 38 : index
    %62 = vector.load %arg2[%c0_80, %c0_81, %c0_82, %c38] : memref<1x1x16x198xbf16, #tpu.memory_space<vmem>>, vector<1x1x16x144xbf16>
    %63 = vector.shape_cast %62 : vector<1x1x16x144xbf16> to vector<16x144xbf16>
    %c8 = arith.constant 8 : index
    %c0_83 = arith.constant 0 : index
    %c0_84 = arith.constant 0 : index
    %64 = vector.load %arg3[%c8, %c0_83, %c0_84] : memref<9x8x16xbf16, #tpu.memory_space<vmem>>, vector<1x8x16xbf16>
    %65 = vector.shape_cast %64 : vector<1x8x16xbf16> to vector<8x16xbf16>
    %cst_85 = arith.constant dense<0.000000e+00> : vector<8x144xf32>
    %66 = tpu.matmul %65, %63, %cst_85 {dimension_numbers = #tpu.dot_dimension_numbers<[1], [0], [0], [1], [0, 0, 1, 1], [], []>} : vector<8x16xbf16>, vector<16x144xbf16>, vector<8x144xf32> -> vector<8x144xf32>
    %c0_86 = arith.constant 0 : index
    %c0_87 = arith.constant 0 : index
    %67 = vector.load %arg6[%c0_86, %c0_87] : memref<8x144xf32, #tpu.memory_space<vmem>>, vector<8x144xf32>
    %68 = arith.addf %67, %66 : vector<8x144xf32>
    %c0_88 = arith.constant 0 : index
    %c0_89 = arith.constant 0 : index
    %69 = vector.load %arg6[%c0_88, %c0_89] : memref<8x144xf32, #tpu.memory_space<vmem>>, vector<8x144xf32>
    tpu.vector_store %arg6[%c0_88, %c0_89], %68 {strides = array<i32>} : memref<8x144xf32, #tpu.memory_space<vmem>>, vector<8x144xf32>,
    %c0_90 = arith.constant 0 : index
    %c0_91 = arith.constant 0 : index
    %70 = vector.load %arg6[%c0_90, %c0_91] : memref<8x144xf32, #tpu.memory_space<vmem>>, vector<8x144xf32>
    %c0_92 = arith.constant 0 : index
    %c0_93 = arith.constant 0 : index
    %71 = vector.load %arg4[%c0_92, %c0_93] : memref<8x1xf32, #tpu.memory_space<vmem>>, vector<8x1xf32>
    %72 = vector.broadcast %71 : vector<8x1xf32> to vector<8x144xf32>
    %73 = arith.addf %70, %72 : vector<8x144xf32>
    %74 = arith.negf %73 : vector<8x144xf32>
    %75 = math.exp %74 : vector<8x144xf32>
    %cst_94 = arith.constant 1.000000e+00 : f32
    %76 = vector.broadcast %cst_94 : f32 to vector<8x144xf32>
    %77 = arith.addf %76, %75 : vector<8x144xf32>
    %78 = arith.divf %76, %77 : vector<8x144xf32>
    %79 = arith.mulf %73, %78 : vector<8x144xf32>
    %80 = arith.truncf %79 : vector<8x144xf32> to vector<8x144xbf16>
    %c0_95 = arith.constant 0 : index
    %c0_96 = arith.constant 0 : index
    %c0_97 = arith.constant 0 : index
    %c0_98 = arith.constant 0 : index
    %81 = vector.load %arg5[%c0_95, %c0_96, %c0_97, %c0_98] : memref<1x1x8x144xbf16, #tpu.memory_space<vmem>>, vector<1x1x8x144xbf16>
    %82 = vector.shape_cast %81 : vector<1x1x8x144xbf16> to vector<8x144xbf16>
    %83 = vector.shape_cast %80 : vector<8x144xbf16> to vector<1x1x8x144xbf16>
    tpu.vector_store %arg5[%c0_95, %c0_96, %c0_97, %c0_98], %83 {strides = array<i32>} : memref<1x1x8x144xbf16, #tpu.memory_space<vmem>>, vector<1x1x8x144xbf16>,
    return
  }
  func.func @transform_0(%arg0: i32, %arg1: i32) -> (i32, i32, i32, i32) {
    %c0_i32 = arith.constant 0 : i32
    %c0_i32_0 = arith.constant 0 : i32
    %c0_i32_1 = arith.constant 0 : i32
    return %arg0, %arg1, %c0_i32, %c0_i32_0 : i32, i32, i32, i32
  }
  func.func @transform_1(%arg0: i32, %arg1: i32) -> (i32, i32, i32) {
    %c0_i32 = arith.constant 0 : i32
    %c0_i32_0 = arith.constant 0 : i32
    %c0_i32_1 = arith.constant 0 : i32
    %c0_i32_2 = arith.constant 0 : i32
    return %c0_i32, %c0_i32_0, %c0_i32_1 : i32, i32, i32
  }
  func.func @transform_2(%arg0: i32, %arg1: i32) -> (i32, i32) {
    %c0_i32 = arith.constant 0 : i32
    %c0_i32_0 = arith.constant 0 : i32
    %c0_i32_1 = arith.constant 0 : i32
    return %c0_i32, %c0_i32_0 : i32, i32
  }
  func.func @transform_3(%arg0: i32, %arg1: i32) -> (i32, i32, i32, i32) {
    %c0_i32 = arith.constant 0 : i32
    %c0_i32_0 = arith.constant 0 : i32
    %c0_i32_1 = arith.constant 0 : i32
    return %arg0, %arg1, %c0_i32, %c0_i32_0 : i32, i32, i32, i32
  }
}

</mosaic_0001>

<llo_original>
// kernel: tpu_custom_call.1
$region0: #{tpu_custom_call.1}
  #allocation0 [shape = 'u32[]', space=smem, size = 0x4, offset = 0x4, fixed_abs, tag = 'smem constant byte address 0x4 - core index']
  #allocation1 [shape = 'u32[144,128]{1,0:T(1,128)}', space=vmem, size = 0x12000, scoped, tag = 'internal scratch']
  #allocation2 [shape = 'f32[8,144]{1,0:T(8,128)}', space=vmem, size = 0x2000, scoped, tag = 'scratch operand']
  %s0 = inlined_call_operand.hbm [shape: bf16[2,2,16,198], index: 0, kind: input, shape index: {}]
  %s1 = inlined_call_operand.hbm [shape: bf16[9,8,16], index: 1, kind: input, shape index: {}]
  %s2 = inlined_call_operand.vmem [shape: f32[8,1], index: 2, kind: input, shape index: {}]
  %s3 = inlined_call_operand.hbm [shape: bf16[2,2,8,144], index: 3, kind: output, shape index: {}]
  %s4 = sld [smem:[#allocation0]]
  $region53: #{tpu_custom_call.1} parent=0
    _
  %s6 = ssub.s32 1, %s4
  %s7 = scalar_select 0, %s6, %s4
  $region1: #{tpu_custom_call.1} parent=0
    #allocation3 [shape = 'u8[16384]{0}', space=vmem, size = 0x4000, scoped, tag = 'input window, operand 0']
    #allocation4 [shape = 's32[2]{0}', space=sflag, size = 0x8, scoped, tag = 'scoped memory for tpu_custom_call.1']
    #allocation5 [shape = 's32[2]{0}', space=sflag, size = 0x8, scoped, tag = 'scoped memory for tpu_custom_call.1']
    #allocation6 [shape = 'u8[18432]{0}', space=vmem, size = 0x4800, scoped, tag = 'input window, operand 1, single buffered']
    #allocation7 [shape = 's32[1]{0}', space=sflag, size = 0x4, scoped, tag = 'scoped memory for tpu_custom_call.1']
    #allocation8 [shape = 'u8[8192]{0}', space=vmem, size = 0x2000, scoped, tag = 'output window, operand 0']
    %8 = vsyncpa [#allocation4], 0
    %s9 = scalar_lea.sflag [#allocation4], 1
    %10 = vsyncpa %s9, 0
    %11 = vsyncpa [#allocation7], 0
    %12 = vsyncpa [#allocation5], 0
    %s13 = scalar_lea.sflag [#allocation5], 1
    %14 = vsyncpa %s13, 0
    loop: start=0, step=1, limit=6
    $region2: #{tpu_custom_call.1} parent=1 // loop_pre_header
      _
    $region3: #{tpu_custom_call.1} parent=1 // loop_header
      %s16 = sphi 0, %s20
      %p17 = scmp.ge.s32.totalorder %s16, 6
      %s23 = sphi 0, %s35
      %s24 = sphi 0, %s31
      %s25 = sphi 0, %s23
      %s26 = sphi 0, %s24
      %s27 = sphi 0, %s25
      %s28 = sphi 0, %s26
      %s40 = sphi 0, %s42
      %s43 = sphi 0, %s40
      %s44 = sphi 0, %s43
      %s60 = sphi 0, %s44
      %s64 = sphi 0, %s64
      %s66 = sphi 0, %s64
      %s67 = sphi 0, %s66
      %s81 = sphi 0, %s67
      %s85 = sphi 0, %s85
      %s87 = sphi 0, %s85
      %s88 = sphi 0, %s87
      %s102 = sphi 0, %s88
      %s110 = sphi 0, %s112
      %s113 = sphi 0, %s110
      %s114 = sphi 0, %s113
      %s130 = sphi 0, %s114
    $region4: #{tpu_custom_call.1} parent=1 // loop_header_branch
      %19 = sbr.rel (%p17) target = $region8
    $region5: #{tpu_custom_call.1} parent=1 // loop_body
      %s21 = ssub.s32 %s16, 1
      %s22 = ssub.s32 %s16, 2
      %s29 = sadd.s32 1, %s24
      %p30 = scmp.ge.s32.totalorder %s29, 2
      %s31 = scalar_select %p30, 0, %s29
      %s32 = sadd.s32 1, %s23
      %s33 = scalar_select %p30, %s32, %s23
      %p34 = scmp.ge.s32.totalorder %s33, 2
      %s35 = scalar_select %p34, 0, %s33
      %s36 = ssub.s32 %s23, %s35
      %s37 = ssub.s32 %s24, %s31
      %s38 = sor.u32 %s36, %s37
      %p39 = scmp.eq.s32.totalorder %s38, 0
      %s41 = sadd.s32 %s40, 1
      %s42 = scalar_select %p39, %s40, %s41
      %p45 = pneg %p39
      %p46 = scmp.eq.s32.totalorder %s16, 3
      %p47 = por %p45, %p46
      %p48 = scmp.ne.s32.totalorder %s40, %s43
      %p49 = scmp.eq.s32.totalorder %s16, 0
      %p50 = por %p48, %p49
      %p51 = scmp.ne.s32.totalorder %s40, %s43
      %p52 = scmp.eq.s32.totalorder %s21, 3
      %p53 = por %p51, %p52
      %p54 = scmp.ne.s32.totalorder %s43, %s44
      %p55 = scmp.eq.s32.totalorder %s21, 0
      %p56 = por %p54, %p55
      %p57 = scmp.ne.s32.totalorder %s43, %s44
      %p58 = scmp.eq.s32.totalorder %s22, 3
      %p59 = por %p57, %p58
      %p61 = scmp.ne.s32.totalorder %s44, %s60
      %p62 = scmp.eq.s32.totalorder %s22, 0
      %p63 = por %p61, %p62
      %s65 = sadd.s32 %s64, 1
      %p68 = scmp.eq.s32.totalorder %s16, 3
      %p69 = scmp.ne.s32.totalorder %s64, %s66
      %p70 = scmp.eq.s32.totalorder %s16, 0
      %p71 = por %p69, %p70
      %p72 = scmp.ne.s32.totalorder %s64, %s66
      %p73 = scmp.eq.s32.totalorder %s21, 3
      %p74 = por %p72, %p73
      %p75 = scmp.ne.s32.totalorder %s66, %s67
      %p76 = scmp.eq.s32.totalorder %s21, 0
      %p77 = por %p75, %p76
      %p78 = scmp.ne.s32.totalorder %s66, %s67
      %p79 = scmp.eq.s32.totalorder %s22, 3
      %p80 = por %p78, %p79
      %p82 = scmp.ne.s32.totalorder %s67, %s81
      %p83 = scmp.eq.s32.totalorder %s22, 0
      %p84 = por %p82, %p83
      %s86 = sadd.s32 %s85, 1
      %p89 = scmp.eq.s32.totalorder %s16, 3
      %p90 = scmp.ne.s32.totalorder %s85, %s87
      %p91 = scmp.eq.s32.totalorder %s16, 0
      %p92 = por %p90, %p91
      %p93 = scmp.ne.s32.totalorder %s85, %s87
      %p94 = scmp.eq.s32.totalorder %s21, 3
      %p95 = por %p93, %p94
      %p96 = scmp.ne.s32.totalorder %s87, %s88
      %p97 = scmp.eq.s32.totalorder %s21, 0
      %p98 = por %p96, %p97
      %p99 = scmp.ne.s32.totalorder %s87, %s88
      %p100 = scmp.eq.s32.totalorder %s22, 3
      %p101 = por %p99, %p100
      %p103 = scmp.ne.s32.totalorder %s88, %s102
      %p104 = scmp.eq.s32.totalorder %s22, 0
      %p105 = por %p103, %p104
      %s106 = ssub.s32 %s23, %s35
      %s107 = ssub.s32 %s24, %s31
      %s108 = sor.u32 %s106, %s107
      %p109 = scmp.eq.s32.totalorder %s108, 0
      %s111 = sadd.s32 %s110, 1
      %s112 = scalar_select %p109, %s110, %s111
      %p115 = pneg %p109
      %p116 = scmp.eq.s32.totalorder %s16, 3
      %p117 = por %p115, %p116
      %p118 = scmp.ne.s32.totalorder %s110, %s113
      %p119 = scmp.eq.s32.totalorder %s16, 0
      %p120 = por %p118, %p119
      %p121 = scmp.ne.s32.totalorder %s110, %s113
      %p122 = scmp.eq.s32.totalorder %s21, 3
      %p123 = por %p121, %p122
      %p124 = scmp.ne.s32.totalorder %s113, %s114
      %p125 = scmp.eq.s32.totalorder %s21, 0
      %p126 = por %p124, %p125
      %p127 = scmp.ne.s32.totalorder %s113, %s114
      %p128 = scmp.eq.s32.totalorder %s22, 3
      %p129 = por %p127, %p128
      %p131 = scmp.ne.s32.totalorder %s114, %s130
      %p132 = scmp.eq.s32.totalorder %s22, 0
      %p133 = por %p131, %p132
      %p134 = scmp.le.s32.totalorder 1, %s16
      %p135 = scmp.lt.s32.totalorder %s16, 5
      %p136 = pnand %p134, %p135
      %p137 = pneg %p136
      // Predicated region
      $region9: #{tpu_custom_call.1} parent=5 // pred_check
        _
      $region10: #{tpu_custom_call.1} parent=5 // pred_check_branch
        %139 = sbr.rel (%p136) target = $region12
      $region11: #{tpu_custom_call.1} parent=5 // pred_region
        %s140 = ssub.s32 %s16, 1
        // Predicated region
        $region13: #{tpu_custom_call.1} parent=11 // pred_check
          %p141 = pneg %p77
        $region14: #{tpu_custom_call.1} parent=11 // pred_check_branch
          %143 = sbr.rel (%p141) target = $region16
        $region15: #{tpu_custom_call.1} parent=11 // pred_region
          %s145 = ssub.s32 576, 576
          %146 = vsyncadd [#allocation7], %s145
          %s147 = sshll.u32 [#allocation6], 4
          %s148 = int_to_ptr.vmem [resolvable:$true] %s147
          %153 = dma.hbm_to_vmem [thread:$0]  %s1, 576, %s148, [#allocation7], 64, 64, 4
        $region16: #{tpu_custom_call.1} parent=11 // pred_fallthru
          _
        // Predicated region
        $region17: #{tpu_custom_call.1} parent=11 // pred_check
          %p154 = pneg %p98
        $region18: #{tpu_custom_call.1} parent=11 // pred_check_branch
          %156 = sbr.rel (%p154) target = $region20
        $region19: #{tpu_custom_call.1} parent=11 // pred_region
          _
        $region20: #{tpu_custom_call.1} parent=11 // pred_fallthru
          _
      $region12: #{tpu_custom_call.1} parent=5 // pred_fallthru
        _
      %p157 = scmp.lt.s32.totalorder %s16, 4
      // Predicated region
      $region21: #{tpu_custom_call.1} parent=5 // pred_check
        %p158 = pneg %p157
      $region22: #{tpu_custom_call.1} parent=5 // pred_check_branch
        %160 = sbr.rel (%p158) target = $region24
      $region23: #{tpu_custom_call.1} parent=5 // pred_region
        // Predicated region
        $region25: #{tpu_custom_call.1} parent=23 // pred_check
          %p161 = pneg %p50
        $region26: #{tpu_custom_call.1} parent=23 // pred_check_branch
          %163 = sbr.rel (%p161) target = $region28
        $region27: #{tpu_custom_call.1} parent=23 // pred_region
          %s164 = sand.u32 %s40, 1
          %s165 = scalar_lea.sflag [#allocation4], %s164
          %s166 = sand.u32 %s40, 1
          %s167 = smul.addr %s166, 16
          %s168 = scalar_lea.vmem [#allocation3], %s167
          %s170 = ssub.s32 256, 256
          %171 = vsyncadd %s165, %s170
          %s172 = smul.addr %s24, 4
          %s173 = smul.addr %s23, 8
          %s174 = sadd.s32 %s172, %s173
          %s175 = smul.addr %s174, 64
          %s176 = scalar_lea.hbm %s0, %s175
          %s177 = sshll.u32 %s168, 4
          %s178 = int_to_ptr.vmem [resolvable:$true] %s177
          %183 = dma.hbm_to_vmem [thread:$0]  %s176, 256, %s178, %s165, 128, 128, 8
        $region28: #{tpu_custom_call.1} parent=23 // pred_fallthru
          _
      $region24: #{tpu_custom_call.1} parent=5 // pred_fallthru
        _
      %p184 = scmp.le.s32.totalorder 1, %s16
      %p185 = scmp.lt.s32.totalorder %s16, 5
      %p186 = pnand %p184, %p185
      %p187 = pneg %p186
      // Predicated region
      $region29: #{tpu_custom_call.1} parent=5 // pred_check
        _
      $region30: #{tpu_custom_call.1} parent=5 // pred_check_branch
        %189 = sbr.rel (%p186) target = $region32
      $region31: #{tpu_custom_call.1} parent=5 // pred_region
        %s190 = ssub.s32 %s16, 1
        %s191 = sand.u32 %s43, 1
        %s192 = scalar_lea.sflag [#allocation4], %s191
        %s193 = sand.u32 %s43, 1
        %s194 = smul.addr %s193, 16
        %s195 = scalar_lea.vmem [#allocation3], %s194
        // Predicated region
        $region33: #{tpu_custom_call.1} parent=31 // pred_check
          %p196 = pneg %p56
        $region34: #{tpu_custom_call.1} parent=31 // pred_check_branch
          %198 = sbr.rel (%p196) target = $region36
        $region35: #{tpu_custom_call.1} parent=31 // pred_region
          %199 = dma.done %s192, 256
        $region36: #{tpu_custom_call.1} parent=31 // pred_fallthru
          _
        // Predicated region
        $region37: #{tpu_custom_call.1} parent=31 // pred_check
          %p200 = pneg %p77
        $region38: #{tpu_custom_call.1} parent=31 // pred_check_branch
          %202 = sbr.rel (%p200) target = $region40
        $region39: #{tpu_custom_call.1} parent=31 // pred_region
          %203 = dma.done [#allocation7], 576
        $region40: #{tpu_custom_call.1} parent=31 // pred_fallthru
          _
        %s204 = sand.u32 %s43, 1
        %s205 = scalar_lea.sflag [#allocation4], %s204
        %s206 = sand.u32 %s43, 1
        %s207 = smul.addr %s206, 16
        %s208 = scalar_lea.vmem [#allocation3], %s207
        %p209 = pneg %p56
        %p210 = pneg %p53
        %p211 = pneg %p77
        %p212 = pneg %p74
        %p213 = pneg %p98
        %p214 = pneg %p95
        %p215 = pneg %p126
        %p216 = pneg %p123
        %s217 = sand.u32 %s113, 1
        %s218 = scalar_lea.sflag [#allocation5], %s217
        %s219 = sand.u32 %s113, 1
        %s220 = smul.addr %s219, 8
        %s221 = scalar_lea.vmem [#allocation8], %s220
        %v223 = vld [vmem:[%s195] sm:$0xff]
        %v224 = vld [vmem:[%s195 + $0x8] sm:$0xff]
        %v225 = vld [vmem:[#allocation6] sm:$0xf]
        %v228 = vunpack.c.l.b16 %v223
        %v229 = vunpack.c.h.b16 %v223
        %v230 = vunpack.c.l.b16 %v224
        %v231 = vunpack.c.h.b16 %v224
        %v232 = vpack.c.b16 %v230, %v228
        %v233 = vpack.c.b16 %v231, %v229
        %vm236 = vcmask 130048
        %v238 = vsel %vm236, %v225, 0
        %240 = vmatprep.subr.bf16.mxu0 %v233
        %241 = vmatpush1.bf16.msra.mxu0 %v232
        %242 = vmatprep.subr.bf16.mxu0 0
        %243 = vmatpush1.bf16.msra.mxu0 0
        %244 = vmatprep.subr.bf16.mxu0 0
        %245 = vmatpush1.bf16.msra.mxu0 0
        %246 = vmatprep.subr.bf16.mxu0 0
        %247 = vmatpush1.bf16.msra.mxu0 0
        %248 = vmatprep.subr.bf16.mxu0 0
        %249 = vmatpush1.bf16.msra.mxu0 0
        %250 = vmatprep.subr.bf16.mxu0 0
        %251 = vmatpush1.bf16.msra.mxu0 0
        %252 = vmatprep.subr.bf16.mxu0 0
        %253 = vmatpush1.bf16.msra.mxu0 0
        %254 = vmatprep.subr.bf16.mxu0 0
        %255 = vmatpush1.bf16.msra.mxu0 0
        %256 = vmatprep.subr.bf16.mxu0 0
        %257 = vmatpush1.bf16.msra.mxu0 0
        %258 = vmatprep.subr.bf16.mxu0 0
        %259 = vmatpush1.bf16.msra.mxu0 0
        %260 = vmatprep.subr.bf16.mxu0 0
        %261 = vmatpush1.bf16.msra.mxu0 0
        %262 = vmatprep.subr.bf16.mxu0 0
        %263 = vmatpush1.bf16.msra.mxu0 0
        %264 = vmatprep.subr.bf16.mxu0 0
        %265 = vmatpush1.bf16.msra.mxu0 0
        %266 = vmatprep.subr.bf16.mxu0 0
        %267 = vmatpush1.bf16.msra.mxu0 0
        %268 = vmatprep.subr.bf16.mxu0 0
        %269 = vmatpush1.bf16.msra.mxu0 0
        %270 = vmatprep.subr.bf16.mxu0 0
        %271 = vmatpush1.bf16.msra.mxu0 0
        %272 = vmatprep.mubr.bf16.mxu0 0
        %273 = vmatmul.mubr.bf16.gmra.mrb[0].mxu0 %v238
        %v274 = vpop.f32.mrb[0].mxu0
        %v275 = vadd.f32 0.0, %v274
        %v276 = vpop.f32.mrb[0].mxu0
        %v277 = vadd.f32 0.0, %v276
        %v278 = vpop.f32.mrb[0].mxu0
        %v279 = vpop.f32.mrb[0].mxu0
        %280 = vdwg.mxu0
        %281 = vst [vmem:[#allocation2] sm:$0xff] %v275
        %282 = vst.msk [vmem:[#allocation2 + $0x8] sm:$0xff] %vm236, %v277
        %v283 = vld [vmem:[%s195] sm:$0xff]
        %v284 = vld [vmem:[%s195 + $0x8] sm:$0xff]
        %s285 = scalar_lea.vmem [#allocation6], 4
        %v286 = vld [vmem:[%s285] sm:$0xf]
        %v289 = vunpack.c.l.b16 %v283
        %v290 = vunpack.c.h.b16 %v283
        %v291 = vunpack.c.l.b16 %v284
        %v292 = vunpack.c.h.b16 %v284
        %v293 = vpack.c.b16 %v291, %v289
        %v294 = vpack.c.b16 %v292, %v290
        %295 = vrot.lane.b32.xlu0 %v293, 127
        %v296 = vpop.permute.xlu0 %295
        %297 = vrot.lane.b32.xlu0 %v294, 127
        %v298 = vpop.permute.xlu0 %297
        %vm299 = vcmask 1039360
        %v300 = vsel %vm299, %v296, %v298
        %v304 = vsel %vm236, %v286, 0
        %306 = vmatprep.subr.bf16.mxu0 %v298
        %307 = vmatpush1.bf16.msra.mxu0 %v300
        %308 = vmatprep.subr.bf16.mxu0 0
        %309 = vmatpush1.bf16.msra.mxu0 0
        %310 = vmatprep.subr.bf16.mxu0 0
        %311 = vmatpush1.bf16.msra.mxu0 0
        %312 = vmatprep.subr.bf16.mxu0 0
        %313 = vmatpush1.bf16.msra.mxu0 0
        %314 = vmatprep.subr.bf16.mxu0 0
        %315 = vmatpush1.bf16.msra.mxu0 0
        %316 = vmatprep.subr.bf16.mxu0 0
        %317 = vmatpush1.bf16.msra.mxu0 0
        %318 = vmatprep.subr.bf16.mxu0 0
        %319 = vmatpush1.bf16.msra.mxu0 0
        %320 = vmatprep.subr.bf16.mxu0 0
        %321 = vmatpush1.bf16.msra.mxu0 0
        %322 = vmatprep.subr.bf16.mxu0 0
        %323 = vmatpush1.bf16.msra.mxu0 0
        %324 = vmatprep.subr.bf16.mxu0 0
        %325 = vmatpush1.bf16.msra.mxu0 0
        %326 = vmatprep.subr.bf16.mxu0 0
        %327 = vmatpush1.bf16.msra.mxu0 0
        %328 = vmatprep.subr.bf16.mxu0 0
        %329 = vmatpush1.bf16.msra.mxu0 0
        %330 = vmatprep.subr.bf16.mxu0 0
        %331 = vmatpush1.bf16.msra.mxu0 0
        %332 = vmatprep.subr.bf16.mxu0 0
        %333 = vmatpush1.bf16.msra.mxu0 0
        %334 = vmatprep.subr.bf16.mxu0 0
        %335 = vmatpush1.bf16.msra.mxu0 0
        %336 = vmatprep.subr.bf16.mxu0 0
        %337 = vmatpush1.bf16.msra.mxu0 0
        %338 = vmatprep.mubr.bf16.mxu0 0
        %339 = vmatmul.mubr.bf16.gmra.mrb[0].mxu0 %v304
        %v340 = vpop.f32.mrb[0].mxu0
        %v341 = vadd.f32 0.0, %v340
        %v342 = vpop.f32.mrb[0].mxu0
        %v343 = vadd.f32 0.0, %v342
        %v344 = vpop.f32.mrb[0].mxu0
        %v345 = vpop.f32.mrb[0].mxu0
        %346 = vdwg.mxu0
        %v347 = vld [vmem:[#allocation2] sm:$0xff]
        %v348 = vld [vmem:[#allocation2 + $0x8] sm:$0xff]
        %v349 = vadd.f32 %v347, %v341
        %v350 = vadd.f32 %v348, %v343
        %351 = vst [vmem:[#allocation2] sm:$0xff] %v349
        %352 = vst.msk [vmem:[#allocation2 + $0x8] sm:$0xff] %vm236, %v350
        %v353 = vld [vmem:[%s195] sm:$0xff]
        %v354 = vld [vmem:[%s195 + $0x8] sm:$0xff]
        %s355 = scalar_lea.vmem [#allocation6], 8
        %v356 = vld [vmem:[%s355] sm:$0xf]
        %v359 = vunpack.c.l.b16 %v353
        %v360 = vunpack.c.h.b16 %v353
        %v361 = vunpack.c.l.b16 %v354
        %v362 = vunpack.c.h.b16 %v354
        %v363 = vpack.c.b16 %v361, %v359
        %v364 = vpack.c.b16 %v362, %v360
        %365 = vrot.lane.b32.xlu0 %v363, 126
        %v366 = vpop.permute.xlu0 %365
        %367 = vrot.lane.b32.xlu0 %v364, 126
        %v368 = vpop.permute.xlu0 %367
        %vm369 = vcmask 1031168
        %v370 = vsel %vm369, %v366, %v368
        %v374 = vsel %vm236, %v356, 0
        %376 = vmatprep.subr.bf16.mxu0 %v368
        %377 = vmatpush1.bf16.msra.mxu0 %v370
        %378 = vmatprep.subr.bf16.mxu0 0
        %379 = vmatpush1.bf16.msra.mxu0 0
        %380 = vmatprep.subr.bf16.mxu0 0
        %381 = vmatpush1.bf16.msra.mxu0 0
        %382 = vmatprep.subr.bf16.mxu0 0
        %383 = vmatpush1.bf16.msra.mxu0 0
        %384 = vmatprep.subr.bf16.mxu0 0
        %385 = vmatpush1.bf16.msra.mxu0 0
        %386 = vmatprep.subr.bf16.mxu0 0
        %387 = vmatpush1.bf16.msra.mxu0 0
        %388 = vmatprep.subr.bf16.mxu0 0
        %389 = vmatpush1.bf16.msra.mxu0 0
        %390 = vmatprep.subr.bf16.mxu0 0
        %391 = vmatpush1.bf16.msra.mxu0 0
        %392 = vmatprep.subr.bf16.mxu0 0
        %393 = vmatpush1.bf16.msra.mxu0 0
        %394 = vmatprep.subr.bf16.mxu0 0
        %395 = vmatpush1.bf16.msra.mxu0 0
        %396 = vmatprep.subr.bf16.mxu0 0
        %397 = vmatpush1.bf16.msra.mxu0 0
        %398 = vmatprep.subr.bf16.mxu0 0
        %399 = vmatpush1.bf16.msra.mxu0 0
        %400 = vmatprep.subr.bf16.mxu0 0
        %401 = vmatpush1.bf16.msra.mxu0 0
        %402 = vmatprep.subr.bf16.mxu0 0
        %403 = vmatpush1.bf16.msra.mxu0 0
        %404 = vmatprep.subr.bf16.mxu0 0
        %405 = vmatpush1.bf16.msra.mxu0 0
        %406 = vmatprep.subr.bf16.mxu0 0
        %407 = vmatpush1.bf16.msra.mxu0 0
        %408 = vmatprep.mubr.bf16.mxu0 0
        %409 = vmatmul.mubr.bf16.gmra.mrb[0].mxu0 %v374
        %v410 = vpop.f32.mrb[0].mxu0
        %v411 = vadd.f32 0.0, %v410
        %v412 = vpop.f32.mrb[0].mxu0
        %v413 = vadd.f32 0.0, %v412
        %v414 = vpop.f32.mrb[0].mxu0
        %v415 = vpop.f32.mrb[0].mxu0
        %416 = vdwg.mxu0
        %v417 = vld [vmem:[#allocation2] sm:$0xff]
        %v418 = vld [vmem:[#allocation2 + $0x8] sm:$0xff]
        %v419 = vadd.f32 %v417, %v411
        %v420 = vadd.f32 %v418, %v413
        %421 = vst [vmem:[#allocation2] sm:$0xff] %v419
        %422 = vst.msk [vmem:[#allocation2 + $0x8] sm:$0xff] %vm236, %v420
        %v423 = vld [vmem:[%s195] sm:$0xff]
        %v424 = vld [vmem:[%s195 + $0x8] sm:$0xff]
        %s425 = scalar_lea.vmem [#allocation6], 12
        %v426 = vld [vmem:[%s425] sm:$0xf]
        %v429 = vunpack.c.l.b16 %v423
        %v430 = vunpack.c.h.b16 %v423
        %v431 = vunpack.c.l.b16 %v424
        %v432 = vunpack.c.h.b16 %v424
        %v433 = vpack.c.b16 %v431, %v429
        %v434 = vpack.c.b16 %v432, %v430
        %435 = vrot.lane.b32.xlu0 %v433, 110
        %v436 = vpop.permute.xlu0 %435
        %437 = vrot.lane.b32.xlu0 %v434, 110
        %v438 = vpop.permute.xlu0 %437
        %vm439 = vcmask 900096
        %v440 = vsel %vm439, %v436, %v438
        %v444 = vsel %vm236, %v426, 0
        %446 = vmatprep.subr.bf16.mxu0 %v438
        %447 = vmatpush1.bf16.msra.mxu0 %v440
        %448 = vmatprep.subr.bf16.mxu0 0
        %449 = vmatpush1.bf16.msra.mxu0 0
        %450 = vmatprep.subr.bf16.mxu0 0
        %451 = vmatpush1.bf16.msra.mxu0 0
        %452 = vmatprep.subr.bf16.mxu0 0
        %453 = vmatpush1.bf16.msra.mxu0 0
        %454 = vmatprep.subr.bf16.mxu0 0
        %455 = vmatpush1.bf16.msra.mxu0 0
        %456 = vmatprep.subr.bf16.mxu0 0
        %457 = vmatpush1.bf16.msra.mxu0 0
        %458 = vmatprep.subr.bf16.mxu0 0
        %459 = vmatpush1.bf16.msra.mxu0 0
        %460 = vmatprep.subr.bf16.mxu0 0
        %461 = vmatpush1.bf16.msra.mxu0 0
        %462 = vmatprep.subr.bf16.mxu0 0
        %463 = vmatpush1.bf16.msra.mxu0 0
        %464 = vmatprep.subr.bf16.mxu0 0
        %465 = vmatpush1.bf16.msra.mxu0 0
        %466 = vmatprep.subr.bf16.mxu0 0
        %467 = vmatpush1.bf16.msra.mxu0 0
        %468 = vmatprep.subr.bf16.mxu0 0
        %469 = vmatpush1.bf16.msra.mxu0 0
        %470 = vmatprep.subr.bf16.mxu0 0
        %471 = vmatpush1.bf16.msra.mxu0 0
        %472 = vmatprep.subr.bf16.mxu0 0
        %473 = vmatpush1.bf16.msra.mxu0 0
        %474 = vmatprep.subr.bf16.mxu0 0
        %475 = vmatpush1.bf16.msra.mxu0 0
        %476 = vmatprep.subr.bf16.mxu0 0
        %477 = vmatpush1.bf16.msra.mxu0 0
        %478 = vmatprep.mubr.bf16.mxu0 0
        %479 = vmatmul.mubr.bf16.gmra.mrb[0].mxu0 %v444
        %v480 = vpop.f32.mrb[0].mxu0
        %v481 = vadd.f32 0.0, %v480
        %v482 = vpop.f32.mrb[0].mxu0
        %v483 = vadd.f32 0.0, %v482
        %v484 = vpop.f32.mrb[0].mxu0
        %v485 = vpop.f32.mrb[0].mxu0
        %486 = vdwg.mxu0
        %v487 = vld [vmem:[#allocation2] sm:$0xff]
        %v488 = vld [vmem:[#allocation2 + $0x8] sm:$0xff]
        %v489 = vadd.f32 %v487, %v481
        %v490 = vadd.f32 %v488, %v483
        %491 = vst [vmem:[#allocation2] sm:$0xff] %v489
        %492 = vst.msk [vmem:[#allocation2 + $0x8] sm:$0xff] %vm236, %v490
        %v493 = vld [vmem:[%s195] sm:$0xff]
        %v494 = vld [vmem:[%s195 + $0x8] sm:$0xff]
        %s495 = scalar_lea.vmem [#allocation6], 16
        %v496 = vld [vmem:[%s495] sm:$0xf]
        %v499 = vunpack.c.l.b16 %v493
        %v500 = vunpack.c.h.b16 %v493
        %v501 = vunpack.c.l.b16 %v494
        %v502 = vunpack.c.h.b16 %v494
        %v503 = vpack.c.b16 %v501, %v499
        %v504 = vpack.c.b16 %v502, %v500
        %505 = vrot.lane.b32.xlu0 %v503, 109
        %v506 = vpop.permute.xlu0 %505
        %507 = vrot.lane.b32.xlu0 %v504, 109
        %v508 = vpop.permute.xlu0 %507
        %vm509 = vcmask 891904
        %v510 = vsel %vm509, %v506, %v508
        %v514 = vsel %vm236, %v496, 0
        %516 = vmatprep.subr.bf16.mxu0 %v508
        %517 = vmatpush1.bf16.msra.mxu0 %v510
        %518 = vmatprep.subr.bf16.mxu0 0
        %519 = vmatpush1.bf16.msra.mxu0 0
        %520 = vmatprep.subr.bf16.mxu0 0
        %521 = vmatpush1.bf16.msra.mxu0 0
        %522 = vmatprep.subr.bf16.mxu0 0
        %523 = vmatpush1.bf16.msra.mxu0 0
        %524 = vmatprep.subr.bf16.mxu0 0
        %525 = vmatpush1.bf16.msra.mxu0 0
        %526 = vmatprep.subr.bf16.mxu0 0
        %527 = vmatpush1.bf16.msra.mxu0 0
        %528 = vmatprep.subr.bf16.mxu0 0
        %529 = vmatpush1.bf16.msra.mxu0 0
        %530 = vmatprep.subr.bf16.mxu0 0
        %531 = vmatpush1.bf16.msra.mxu0 0
        %532 = vmatprep.subr.bf16.mxu0 0
        %533 = vmatpush1.bf16.msra.mxu0 0
        %534 = vmatprep.subr.bf16.mxu0 0
        %535 = vmatpush1.bf16.msra.mxu0 0
        %536 = vmatprep.subr.bf16.mxu0 0
        %537 = vmatpush1.bf16.msra.mxu0 0
        %538 = vmatprep.subr.bf16.mxu0 0
        %539 = vmatpush1.bf16.msra.mxu0 0
        %540 = vmatprep.subr.bf16.mxu0 0
        %541 = vmatpush1.bf16.msra.mxu0 0
        %542 = vmatprep.subr.bf16.mxu0 0
        %543 = vmatpush1.bf16.msra.mxu0 0
        %544 = vmatprep.subr.bf16.mxu0 0
        %545 = vmatpush1.bf16.msra.mxu0 0
        %546 = vmatprep.subr.bf16.mxu0 0
        %547 = vmatpush1.bf16.msra.mxu0 0
        %548 = vmatprep.mubr.bf16.mxu0 0
        %549 = vmatmul.mubr.bf16.gmra.mrb[0].mxu0 %v514
        %v550 = vpop.f32.mrb[0].mxu0
        %v551 = vadd.f32 0.0, %v550
        %v552 = vpop.f32.mrb[0].mxu0
        %v553 = vadd.f32 0.0, %v552
        %v554 = vpop.f32.mrb[0].mxu0
        %v555 = vpop.f32.mrb[0].mxu0
        %556 = vdwg.mxu0
        %v557 = vld [vmem:[#allocation2] sm:$0xff]
        %v558 = vld [vmem:[#allocation2 + $0x8] sm:$0xff]
        %v559 = vadd.f32 %v557, %v551
        %v560 = vadd.f32 %v558, %v553
        %561 = vst [vmem:[#allocation2] sm:$0xff] %v559
        %562 = vst.msk [vmem:[#allocation2 + $0x8] sm:$0xff] %vm236, %v560
        %v563 = vld [vmem:[%s195] sm:$0xff]
        %v564 = vld [vmem:[%s195 + $0x8] sm:$0xff]
        %s565 = scalar_lea.vmem [#allocation6], 20
        %v566 = vld [vmem:[%s565] sm:$0xf]
        %v569 = vunpack.c.l.b16 %v563
        %v570 = vunpack.c.h.b16 %v563
        %v571 = vunpack.c.l.b16 %v564
        %v572 = vunpack.c.h.b16 %v564
        %v573 = vpack.c.b16 %v571, %v569
        %v574 = vpack.c.b16 %v572, %v570
        %575 = vrot.lane.b32.xlu0 %v573, 108
        %v576 = vpop.permute.xlu0 %575
        %577 = vrot.lane.b32.xlu0 %v574, 108
        %v578 = vpop.permute.xlu0 %577
        %vm579 = vcmask 883712
        %v580 = vsel %vm579, %v576, %v578
        %v584 = vsel %vm236, %v566, 0
        %586 = vmatprep.subr.bf16.mxu0 %v578
        %587 = vmatpush1.bf16.msra.mxu0 %v580
        %588 = vmatprep.subr.bf16.mxu0 0
        %589 = vmatpush1.bf16.msra.mxu0 0
        %590 = vmatprep.subr.bf16.mxu0 0
        %591 = vmatpush1.bf16.msra.mxu0 0
        %592 = vmatprep.subr.bf16.mxu0 0
        %593 = vmatpush1.bf16.msra.mxu0 0
        %594 = vmatprep.subr.bf16.mxu0 0
        %595 = vmatpush1.bf16.msra.mxu0 0
        %596 = vmatprep.subr.bf16.mxu0 0
        %597 = vmatpush1.bf16.msra.mxu0 0
        %598 = vmatprep.subr.bf16.mxu0 0
        %599 = vmatpush1.bf16.msra.mxu0 0
        %600 = vmatprep.subr.bf16.mxu0 0
        %601 = vmatpush1.bf16.msra.mxu0 0
        %602 = vmatprep.subr.bf16.mxu0 0
        %603 = vmatpush1.bf16.msra.mxu0 0
        %604 = vmatprep.subr.bf16.mxu0 0
        %605 = vmatpush1.bf16.msra.mxu0 0
        %606 = vmatprep.subr.bf16.mxu0 0
        %607 = vmatpush1.bf16.msra.mxu0 0
        %608 = vmatprep.subr.bf16.mxu0 0
        %609 = vmatpush1.bf16.msra.mxu0 0
        %610 = vmatprep.subr.bf16.mxu0 0
        %611 = vmatpush1.bf16.msra.mxu0 0
        %612 = vmatprep.subr.bf16.mxu0 0
        %613 = vmatpush1.bf16.msra.mxu0 0
        %614 = vmatprep.subr.bf16.mxu0 0
        %615 = vmatpush1.bf16.msra.mxu0 0
        %616 = vmatprep.subr.bf16.mxu0 0
        %617 = vmatpush1.bf16.msra.mxu0 0
        %618 = vmatprep.mubr.bf16.mxu0 0
        %619 = vmatmul.mubr.bf16.gmra.mrb[0].mxu0 %v584
        %v620 = vpop.f32.mrb[0].mxu0
        %v621 = vadd.f32 0.0, %v620
        %v622 = vpop.f32.mrb[0].mxu0
        %v623 = vadd.f32 0.0, %v622
        %v624 = vpop.f32.mrb[0].mxu0
        %v625 = vpop.f32.mrb[0].mxu0
        %626 = vdwg.mxu0
        %v627 = vld [vmem:[#allocation2] sm:$0xff]
        %v628 = vld [vmem:[#allocation2 + $0x8] sm:$0xff]
        %v629 = vadd.f32 %v627, %v621
        %v630 = vadd.f32 %v628, %v623
        %631 = vst [vmem:[#allocation2] sm:$0xff] %v629
        %632 = vst.msk [vmem:[#allocation2 + $0x8] sm:$0xff] %vm236, %v630
        %v633 = vld [vmem:[%s195] sm:$0xff]
        %v634 = vld [vmem:[%s195 + $0x8] sm:$0xff]
        %s635 = scalar_lea.vmem [#allocation6], 24
        %v636 = vld [vmem:[%s635] sm:$0xf]
        %v639 = vunpack.c.l.b16 %v633
        %v640 = vunpack.c.h.b16 %v633
        %v641 = vunpack.c.l.b16 %v634
        %v642 = vunpack.c.h.b16 %v634
        %v643 = vpack.c.b16 %v641, %v639
        %v644 = vpack.c.b16 %v642, %v640
        %645 = vrot.lane.b32.xlu0 %v643, 92
        %v646 = vpop.permute.xlu0 %645
        %647 = vrot.lane.b32.xlu0 %v644, 92
        %v648 = vpop.permute.xlu0 %647
        %vm649 = vcmask 752640
        %v650 = vsel %vm649, %v646, %v648
        %v654 = vsel %vm236, %v636, 0
        %656 = vmatprep.subr.bf16.mxu0 %v648
        %657 = vmatpush1.bf16.msra.mxu0 %v650
        %658 = vmatprep.subr.bf16.mxu0 0
        %659 = vmatpush1.bf16.msra.mxu0 0
        %660 = vmatprep.subr.bf16.mxu0 0
        %661 = vmatpush1.bf16.msra.mxu0 0
        %662 = vmatprep.subr.bf16.mxu0 0
        %663 = vmatpush1.bf16.msra.mxu0 0
        %664 = vmatprep.subr.bf16.mxu0 0
        %665 = vmatpush1.bf16.msra.mxu0 0
        %666 = vmatprep.subr.bf16.mxu0 0
        %667 = vmatpush1.bf16.msra.mxu0 0
        %668 = vmatprep.subr.bf16.mxu0 0
        %669 = vmatpush1.bf16.msra.mxu0 0
        %670 = vmatprep.subr.bf16.mxu0 0
        %671 = vmatpush1.bf16.msra.mxu0 0
        %672 = vmatprep.subr.bf16.mxu0 0
        %673 = vmatpush1.bf16.msra.mxu0 0
        %674 = vmatprep.subr.bf16.mxu0 0
        %675 = vmatpush1.bf16.msra.mxu0 0
        %676 = vmatprep.subr.bf16.mxu0 0
        %677 = vmatpush1.bf16.msra.mxu0 0
        %678 = vmatprep.subr.bf16.mxu0 0
        %679 = vmatpush1.bf16.msra.mxu0 0
        %680 = vmatprep.subr.bf16.mxu0 0
        %681 = vmatpush1.bf16.msra.mxu0 0
        %682 = vmatprep.subr.bf16.mxu0 0
        %683 = vmatpush1.bf16.msra.mxu0 0
        %684 = vmatprep.subr.bf16.mxu0 0
        %685 = vmatpush1.bf16.msra.mxu0 0
        %686 = vmatprep.subr.bf16.mxu0 0
        %687 = vmatpush1.bf16.msra.mxu0 0
        %688 = vmatprep.mubr.bf16.mxu0 0
        %689 = vmatmul.mubr.bf16.gmra.mrb[0].mxu0 %v654
        %v690 = vpop.f32.mrb[0].mxu0
        %v691 = vadd.f32 0.0, %v690
        %v692 = vpop.f32.mrb[0].mxu0
        %v693 = vadd.f32 0.0, %v692
        %v694 = vpop.f32.mrb[0].mxu0
        %v695 = vpop.f32.mrb[0].mxu0
        %696 = vdwg.mxu0
        %v697 = vld [vmem:[#allocation2] sm:$0xff]
        %v698 = vld [vmem:[#allocation2 + $0x8] sm:$0xff]
        %v699 = vadd.f32 %v697, %v691
        %v700 = vadd.f32 %v698, %v693
        %701 = vst [vmem:[#allocation2] sm:$0xff] %v699
        %702 = vst.msk [vmem:[#allocation2 + $0x8] sm:$0xff] %vm236, %v700
        %v703 = vld [vmem:[%s195] sm:$0xff]
        %v704 = vld [vmem:[%s195 + $0x8] sm:$0xff]
        %s705 = scalar_lea.vmem [#allocation6], 28
        %v706 = vld [vmem:[%s705] sm:$0xf]
        %v709 = vunpack.c.l.b16 %v703
        %v710 = vunpack.c.h.b16 %v703
        %v711 = vunpack.c.l.b16 %v704
        %v712 = vunpack.c.h.b16 %v704
        %v713 = vpack.c.b16 %v711, %v709
        %v714 = vpack.c.b16 %v712, %v710
        %715 = vrot.lane.b32.xlu0 %v713, 91
        %v716 = vpop.permute.xlu0 %715
        %717 = vrot.lane.b32.xlu0 %v714, 91
        %v718 = vpop.permute.xlu0 %717
        %vm719 = vcmask 744448
        %v720 = vsel %vm719, %v716, %v718
        %v724 = vsel %vm236, %v706, 0
        %726 = vmatprep.subr.bf16.mxu0 %v718
        %727 = vmatpush1.bf16.msra.mxu0 %v720
        %728 = vmatprep.subr.bf16.mxu0 0
        %729 = vmatpush1.bf16.msra.mxu0 0
        %730 = vmatprep.subr.bf16.mxu0 0
        %731 = vmatpush1.bf16.msra.mxu0 0
        %732 = vmatprep.subr.bf16.mxu0 0
        %733 = vmatpush1.bf16.msra.mxu0 0
        %734 = vmatprep.subr.bf16.mxu0 0
        %735 = vmatpush1.bf16.msra.mxu0 0
        %736 = vmatprep.subr.bf16.mxu0 0
        %737 = vmatpush1.bf16.msra.mxu0 0
        %738 = vmatprep.subr.bf16.mxu0 0
        %739 = vmatpush1.bf16.msra.mxu0 0
        %740 = vmatprep.subr.bf16.mxu0 0
        %741 = vmatpush1.bf16.msra.mxu0 0
        %742 = vmatprep.subr.bf16.mxu0 0
        %743 = vmatpush1.bf16.msra.mxu0 0
        %744 = vmatprep.subr.bf16.mxu0 0
        %745 = vmatpush1.bf16.msra.mxu0 0
        %746 = vmatprep.subr.bf16.mxu0 0
        %747 = vmatpush1.bf16.msra.mxu0 0
        %748 = vmatprep.subr.bf16.mxu0 0
        %749 = vmatpush1.bf16.msra.mxu0 0
        %750 = vmatprep.subr.bf16.mxu0 0
        %751 = vmatpush1.bf16.msra.mxu0 0
        %752 = vmatprep.subr.bf16.mxu0 0
        %753 = vmatpush1.bf16.msra.mxu0 0
        %754 = vmatprep.subr.bf16.mxu0 0
        %755 = vmatpush1.bf16.msra.mxu0 0
        %756 = vmatprep.subr.bf16.mxu0 0
        %757 = vmatpush1.bf16.msra.mxu0 0
        %758 = vmatprep.mubr.bf16.mxu0 0
        %759 = vmatmul.mubr.bf16.gmra.mrb[0].mxu0 %v724
        %v760 = vpop.f32.mrb[0].mxu0
        %v761 = vadd.f32 0.0, %v760
        %v762 = vpop.f32.mrb[0].mxu0
        %v763 = vadd.f32 0.0, %v762
        %v764 = vpop.f32.mrb[0].mxu0
        %v765 = vpop.f32.mrb[0].mxu0
        %766 = vdwg.mxu0
        %v767 = vld [vmem:[#allocation2] sm:$0xff]
        %v768 = vld [vmem:[#allocation2 + $0x8] sm:$0xff]
        %v769 = vadd.f32 %v767, %v761
        %v770 = vadd.f32 %v768, %v763
        %771 = vst [vmem:[#allocation2] sm:$0xff] %v769
        %772 = vst.msk [vmem:[#allocation2 + $0x8] sm:$0xff] %vm236, %v770
        %v773 = vld [vmem:[%s195] sm:$0xff]
        %v774 = vld [vmem:[%s195 + $0x8] sm:$0xff]
        %s775 = scalar_lea.vmem [#allocation6], 32
        %v776 = vld [vmem:[%s775] sm:$0xf]
        %v779 = vunpack.c.l.b16 %v773
        %v780 = vunpack.c.h.b16 %v773
        %v781 = vunpack.c.l.b16 %v774
        %v782 = vunpack.c.h.b16 %v774
        %v783 = vpack.c.b16 %v781, %v779
        %v784 = vpack.c.b16 %v782, %v780
        %785 = vrot.lane.b32.xlu0 %v783, 90
        %v786 = vpop.permute.xlu0 %785
        %787 = vrot.lane.b32.xlu0 %v784, 90
        %v788 = vpop.permute.xlu0 %787
        %vm789 = vcmask 736256
        %v790 = vsel %vm789, %v786, %v788
        %v794 = vsel %vm236, %v776, 0
        %796 = vmatprep.subr.bf16.mxu0 %v788
        %797 = vmatpush1.bf16.msra.mxu0 %v790
        %798 = vmatprep.subr.bf16.mxu0 0
        %799 = vmatpush1.bf16.msra.mxu0 0
        %800 = vmatprep.subr.bf16.mxu0 0
        %801 = vmatpush1.bf16.msra.mxu0 0
        %802 = vmatprep.subr.bf16.mxu0 0
        %803 = vmatpush1.bf16.msra.mxu0 0
        %804 = vmatprep.subr.bf16.mxu0 0
        %805 = vmatpush1.bf16.msra.mxu0 0
        %806 = vmatprep.subr.bf16.mxu0 0
        %807 = vmatpush1.bf16.msra.mxu0 0
        %808 = vmatprep.subr.bf16.mxu0 0
        %809 = vmatpush1.bf16.msra.mxu0 0
        %810 = vmatprep.subr.bf16.mxu0 0
        %811 = vmatpush1.bf16.msra.mxu0 0
        %812 = vmatprep.subr.bf16.mxu0 0
        %813 = vmatpush1.bf16.msra.mxu0 0
        %814 = vmatprep.subr.bf16.mxu0 0
        %815 = vmatpush1.bf16.msra.mxu0 0
        %816 = vmatprep.subr.bf16.mxu0 0
        %817 = vmatpush1.bf16.msra.mxu0 0
        %818 = vmatprep.subr.bf16.mxu0 0
        %819 = vmatpush1.bf16.msra.mxu0 0
        %820 = vmatprep.subr.bf16.mxu0 0
        %821 = vmatpush1.bf16.msra.mxu0 0
        %822 = vmatprep.subr.bf16.mxu0 0
        %823 = vmatpush1.bf16.msra.mxu0 0
        %824 = vmatprep.subr.bf16.mxu0 0
        %825 = vmatpush1.bf16.msra.mxu0 0
        %826 = vmatprep.subr.bf16.mxu0 0
        %827 = vmatpush1.bf16.msra.mxu0 0
        %828 = vmatprep.mubr.bf16.mxu0 0
        %829 = vmatmul.mubr.bf16.gmra.mrb[0].mxu0 %v794
        %v830 = vpop.f32.mrb[0].mxu0
        %v831 = vadd.f32 0.0, %v830
        %v832 = vpop.f32.mrb[0].mxu0
        %v833 = vadd.f32 0.0, %v832
        %v834 = vpop.f32.mrb[0].mxu0
        %v835 = vpop.f32.mrb[0].mxu0
        %836 = vdwg.mxu0
        %v837 = vld [vmem:[#allocation2] sm:$0xff]
        %v838 = vld [vmem:[#allocation2 + $0x8] sm:$0xff]
        %v839 = vadd.f32 %v837, %v831
        %v840 = vadd.f32 %v838, %v833
        %841 = vst [vmem:[#allocation2] sm:$0xff] %v839
        %842 = vst.msk [vmem:[#allocation2 + $0x8] sm:$0xff] %vm236, %v840
        %v843 = vld [vmem:[#allocation2] sm:$0xff]
        %v844 = vld [vmem:[#allocation2 + $0x8] sm:$0xff]
        %v845 = vld [vmem:[%s2] sm:$0xff]
        %847 = vset.pattern.permute.xlu0 0
        %848 = vperm.xlu0 %847, %v845
        %v849 = vpop.permute.xlu0 %848
        %v851 = vadd.f32 %v843, %v849
        %v852 = vadd.f32 %v844, %v849
        %v853 = vxor.u32 %v851, 2147483648
        %v854 = vxor.u32 %v852, 2147483648
        %v855 = vmul.f32 %v853, 1.442695
        %v856 = vpow.pop %v855
        %v857 = vmul.f32 %v854, 1.442695
        %v858 = vpow.pop %v857
        %v859 = vadd.f32 %v856, 1.0
        %v860 = vadd.f32 %v858, 1.0
        %v861 = vrcp.pop %v859
        %v862 = vmul.f32 1.0, %v861
        %v863 = vrcp.pop %v860
        %v864 = vmul.f32 1.0, %v863
        %v865 = vmul.f32 %v851, %v862
        %v866 = vmul.f32 %v852, %v864
        %v867 = vpack.c.bf16 %v865, %v865
        %v868 = vpack.c.bf16 %v866, %v866
        %v871 = vunpack.c.l.b16 %v867
        %v872 = vunpack.c.l.b16 %v868
        %v873 = vpack.c.b16 %v872, %v871
        %vm875 = vcmask 1043456
        %vm876 = vcmask 130052
        %vm877 = vmor %vm876, %vm875
        %878 = vst.msk [vmem:[%s221] sm:$0xff] %vm877, %v873
        %s879 = sand.u32 %s113, 1
        %s880 = scalar_lea.sflag [#allocation5], %s879
        %s881 = sand.u32 %s113, 1
        %s882 = smul.addr %s881, 8
        %s883 = scalar_lea.vmem [#allocation8], %s882
        // Predicated region
        $region41: #{tpu_custom_call.1} parent=31 // pred_check
          %p884 = pneg %p123
        $region42: #{tpu_custom_call.1} parent=31 // pred_check_branch
          %886 = sbr.rel (%p884) target = $region44
        $region43: #{tpu_custom_call.1} parent=31 // pred_region
          %s888 = ssub.s32 128, 128
          %889 = vsyncadd %s880, %s888
          %s890 = smul.addr %s26, 2
          %s891 = smul.addr %s25, 4
          %s892 = sadd.s32 %s890, %s891
          %s893 = smul.addr %s892, 64
          %s894 = scalar_lea.hbm %s3, %s893
          %s896 = sshll.u32 %s883, 4
          %s897 = int_to_ptr.vmem [resolvable:$true] %s896
          %899 = dma.vmem_to_hbm [thread:$0]  %s897, 128, %s894, %s880
        $region44: #{tpu_custom_call.1} parent=31 // pred_fallthru
          _
      $region32: #{tpu_custom_call.1} parent=5 // pred_fallthru
        _
      %p900 = scmp.le.s32.totalorder 2, %s16
      // Predicated region
      $region45: #{tpu_custom_call.1} parent=5 // pred_check
        %p901 = pneg %p900
      $region46: #{tpu_custom_call.1} parent=5 // pred_check_branch
        %903 = sbr.rel (%p901) target = $region48
      $region47: #{tpu_custom_call.1} parent=5 // pred_region
        %s904 = ssub.s32 %s16, 2
        // Predicated region
        $region49: #{tpu_custom_call.1} parent=47 // pred_check
          %p905 = pneg %p129
        $region50: #{tpu_custom_call.1} parent=47 // pred_check_branch
          %907 = sbr.rel (%p905) target = $region52
        $region51: #{tpu_custom_call.1} parent=47 // pred_region
          %s908 = sand.u32 %s114, 1
          %s909 = scalar_lea.sflag [#allocation5], %s908
          %s910 = sand.u32 %s114, 1
          %s911 = smul.addr %s910, 8
          %s912 = scalar_lea.vmem [#allocation8], %s911
          %913 = dma.done %s909, 128
        $region52: #{tpu_custom_call.1} parent=47 // pred_fallthru
          _
      $region48: #{tpu_custom_call.1} parent=5 // pred_fallthru
        _
    $region6: #{tpu_custom_call.1} parent=1 // loop_footer
      %s20 = sadd.s32 1, %s16
    $region7: #{tpu_custom_call.1} parent=1 // loop_footer_branch
      %15 = sbr.rel target = $region3
    $region8: #{tpu_custom_call.1} parent=1 // loop_exit
      _
    %914 = vsyncpa [#allocation4], 1
    %s915 = scalar_lea.sflag [#allocation4], 1
    %916 = vsyncpa %s915, 1
    %917 = vsyncpa [#allocation7], 1
    %918 = vsyncpa [#allocation5], 1
    %s919 = scalar_lea.sflag [#allocation5], 1
    %920 = vsyncpa %s919, 1

</llo_original>
